<compile_context>
chip_gen: v5e
topology: v5e:2x2
jax: 0.10.0
libtpu: 0.0.40
codegen_flags: <defaults>
</compile_context>

<pallas_src>
import functools

import jax
import jax.numpy as jnp
from jax.experimental import pallas as pl
from jax.experimental.pallas import tpu as pltpu

_LANE = 128
_SUBLANE = 8
_NEG_INF = -1e30


def _round_up(n, m):
    return ((n + m - 1) // m) * m


# ----------------------------------------------------------------------------
# Fused kernel: all Linear(+ReLU) layers and the final softmax in one body.
# ----------------------------------------------------------------------------
def _mlp_fused_kernel(x_ref, *refs, num_layers):
    """refs = (w0, b0, w1, b1, ..., w_{L-1}, b_{L-1}, out_ref).

    Weights are bf16, pre-transposed to (in, out), lane-padded; biases are f32
    with the last layer's padded lanes set to -1e30.  Intermediates never
    leave VMEM / vregs.
    """
    out_ref = refs[-1]

    h = x_ref[...]                                            # f32 (tm, Din)
    for l in range(num_layers):
        w = refs[2 * l][...]                                  # bf16 (Din_l, Dout_l)
        b = refs[2 * l + 1][...]                              # f32  (1, Dout_l)
        # bf16 MXU operands, f32 accumulation.
        h = jnp.dot(h.astype(jnp.bfloat16), w,
                    preferred_element_type=jnp.float32) + b
        if l < num_layers - 1:
            h = jnp.maximum(h, 0.0)                           # ReLU activation

    # Numerically stable softmax along dim=1 (padded logits = -1e30 -> exp 0).
    m = jnp.max(h, axis=1, keepdims=True)
    e = jnp.exp(h - m)
    denom = jnp.sum(e, axis=1, keepdims=True)
    out_ref[...] = (e / denom).astype(out_ref.dtype)          # exact divide


# ----------------------------------------------------------------------------
# Parameter init (PyTorch nn.Linear layout + init) and one-time preparation
# ----------------------------------------------------------------------------
def init_mlp_params(key, input_size, hidden_sizes, output_size):
    """Raw params in PyTorch convention: W is (out, in), b is (out,)."""
    sizes = [input_size] + list(hidden_sizes) + [output_size]
    params = []
    for i in range(len(sizes) - 1):
        fan_in, fan_out = sizes[i], sizes[i + 1]
        key, kw, kb = jax.random.split(key, 3)
        bound = 1.0 / jnp.sqrt(fan_in)
        w = jax.random.uniform(kw, (fan_out, fan_in), jnp.float32, -bound, bound)
        b = jax.random.uniform(kb, (fan_out,), jnp.float32, -bound, bound)
        params.append((w, b))
    return params


def prepare_params(params):
    """One-time prep (off the hot path):
    - transpose W to (in, out), cast to bf16
    - zero-pad every output dim to a multiple of 128 (lane-dense)
    - pad each layer's input dim to the previous layer's padded output
    - final layer: padded bias lanes = -1e30 so softmax ignores padded logits
    - biases stay f32 (post-matmul elementwise math stays f32)
    """
    prepped = []
    n = len(params)
    in_dim_prev = None
    for i, (w, b) in enumerate(params):
        fan_out, fan_in = w.shape
        in_dim = fan_in if i == 0 else in_dim_prev          # x itself is NOT padded
        out_pad = _round_up(fan_out, _LANE)

        w_p = jnp.zeros((in_dim, out_pad), jnp.float32)
        w_p = w_p.at[:fan_in, :fan_out].set(w.T)
        w_p = w_p.astype(jnp.bfloat16)                      # MXU-native operand

        if i == n - 1:
            b_p = jnp.full((1, out_pad), _NEG_INF, jnp.float32)
        else:
            b_p = jnp.zeros((1, out_pad), jnp.float32)
        b_p = b_p.at[:, :fan_out].set(b.reshape(1, -1))

        prepped.append((w_p, b_p))
        in_dim_prev = out_pad
    return prepped


# ----------------------------------------------------------------------------
# Forward pass: ONE pallas_call, batch-tiled grid, weights VMEM-resident.
# ----------------------------------------------------------------------------
@functools.partial(jax.jit, static_argnames=("output_size",))
def mlp_forward(prepped_params, x, *, output_size):
    batch, in_dim = x.shape
    num_layers = len(prepped_params)
    out_pad = prepped_params[-1][0].shape[1]

    # Batch tile: >=8 (sublane), <=512 (v7x-safe headroom with weights resident).
    tm = 512 if batch >= 512 else _round_up(batch, _SUBLANE)
    b_pad = _round_up(batch, tm)
    if b_pad != batch:
        x = jnp.pad(x, ((0, b_pad - batch), (0, 0)))
    grid = (b_pad // tm,)

    flat = []
    in_specs = [pl.BlockSpec((tm, in_dim), lambda i: (i, 0))]      # x tiles
    for w, b in prepped_params:
        flat.append(w)
        flat.append(b)
        # Constant block index -> weights/biases DMA'd once, resident across
        # all batch tiles of the grid.
        in_specs.append(pl.BlockSpec(w.shape, lambda i: (0, 0)))
        in_specs.append(pl.BlockSpec(b.shape, lambda i: (0, 0)))
    out_specs = pl.BlockSpec((tm, out_pad), lambda i: (i, 0))

    # Explicit VMEM budget: resident params + double-buffered x/out tiles.
    param_bytes = sum(int(w.size) * w.dtype.itemsize +
                      int(b.size) * b.dtype.itemsize
                      for w, b in prepped_params)
    tile_bytes = tm * in_dim * 4 + tm * out_pad * 4
    vmem_limit = int(min(64 * 1024 * 1024,
                         max(16 * 1024 * 1024,
                             2 * (param_bytes + 2 * tile_bytes))))

    kernel = functools.partial(_mlp_fused_kernel, num_layers=num_layers)
    out_padded = pl.pallas_call(
        kernel,
        out_shape=jax.ShapeDtypeStruct((b_pad, out_pad), jnp.float32),
        grid=grid,
        in_specs=in_specs,
        out_specs=out_specs,
        compiler_params=pltpu.CompilerParams(
            dimension_semantics=("parallel",),     # shards across v7x's 2 TCs
            vmem_limit_bytes=vmem_limit,
        ),
    )(x, *flat)
    # Drop batch padding and padded lanes (padded lanes have probability 0).
    return out_padded[:batch, :output_size]


# ----------------------------------------------------------------------------
# Pure-JAX reference (raw, unpadded PyTorch-convention params, f32 throughout)
# ----------------------------------------------------------------------------
def mlp_forward_ref(params, x):
    h = x
    for (w, b) in params[:-1]:
        h = jnp.maximum(h @ w.T + b, 0.0)
    w, b = params[-1]
    return jax.nn.softmax(h @ w.T + b, axis=1)


if __name__ == "__main__":
    key = jax.random.PRNGKey(0)
    k_params, k_x = jax.random.split(key)

    batch = 8
    input_size = 32
    hidden_sizes = [64, 48]
    output_size = 16

    params = init_mlp_params(k_params, input_size, hidden_sizes, output_size)
    prepped = prepare_params(params)          # one-time: transpose + pad + bf16
    x = jax.random.normal(k_x, (batch, input_size), jnp.float32)

    out = mlp_forward(prepped, x, output_size=output_size)
    out = jax.block_until_ready(out)

    ref = mlp_forward_ref(params, x)
    assert out.shape == (batch, output_size)
    # bf16 MXU operands vs f32 reference -> ~1e-3-level differences expected.
    assert jnp.allclose(out, ref, atol=1e-2, rtol=1e-2), "mismatch vs reference"
    # Exact divide in the softmax -> rows sum to 1 to f32 precision.
    assert jnp.allclose(jnp.sum(out, axis=1), 1.0, atol=1e-4)

    print("KERNEL_OK")
</pallas_src>

<mosaic_0001>
module attributes {stable_mosaic.version = 11 : i64} {
  func.func @_mlp_fused_kernel(%arg0: i32, %arg1: memref<8x32xf32, #tpu.memory_space<vmem>>, %arg2: memref<32x128xbf16, #tpu.memory_space<vmem>>, %arg3: memref<1x128xf32, #tpu.memory_space<vmem>>, %arg4: memref<128x128xbf16, #tpu.memory_space<vmem>>, %arg5: memref<1x128xf32, #tpu.memory_space<vmem>>, %arg6: memref<128x128xbf16, #tpu.memory_space<vmem>>, %arg7: memref<1x128xf32, #tpu.memory_space<vmem>>, %arg8: memref<8x128xf32, #tpu.memory_space<vmem>>) attributes {dimension_semantics = [#tpu.dimension_semantics<parallel>], iteration_bounds = array<i64: 1>, scalar_prefetch = 0 : i64, scratch_operands = 0 : i64, tpu.core_type = #tpu.core_type<tc>, window_params = [{transform_indices = @transform_0, window_bounds = array<i64: 8, 32>}, {pipeline_mode = #tpu.pipeline_mode<synchronous>, transform_indices = @transform_1, window_bounds = array<i64: 32, 128>}, {pipeline_mode = #tpu.pipeline_mode<synchronous>, transform_indices = @transform_2, window_bounds = array<i64: 1, 128>}, {pipeline_mode = #tpu.pipeline_mode<synchronous>, transform_indices = @transform_3, window_bounds = array<i64: 128, 128>}, {pipeline_mode = #tpu.pipeline_mode<synchronous>, transform_indices = @transform_4, window_bounds = array<i64: 1, 128>}, {pipeline_mode = #tpu.pipeline_mode<synchronous>, transform_indices = @transform_5, window_bounds = array<i64: 128, 128>}, {pipeline_mode = #tpu.pipeline_mode<synchronous>, transform_indices = @transform_6, window_bounds = array<i64: 1, 128>}, {transform_indices = @transform_7, window_bounds = array<i64: 8, 128>}]} {
    %c0 = arith.constant 0 : index
    %c0_0 = arith.constant 0 : index
    %0 = vector.load %arg1[%c0, %c0_0] : memref<8x32xf32, #tpu.memory_space<vmem>>, vector<8x32xf32>
    %c0_1 = arith.constant 0 : index
    %c0_2 = arith.constant 0 : index
    %1 = vector.load %arg2[%c0_1, %c0_2] : memref<32x128xbf16, #tpu.memory_space<vmem>>, vector<32x128xbf16>
    %c0_3 = arith.constant 0 : index
    %c0_4 = arith.constant 0 : index
    %2 = vector.load %arg3[%c0_3, %c0_4] : memref<1x128xf32, #tpu.memory_space<vmem>>, vector<1x128xf32>
    %3 = arith.truncf %0 : vector<8x32xf32> to vector<8x32xbf16>
    %cst = arith.constant dense<0.000000e+00> : vector<8x128xf32>
    %4 = tpu.matmul %3, %1, %cst {dimension_numbers = #tpu.dot_dimension_numbers<[1], [0], [0], [1], [0, 0, 1, 1], [], []>} : vector<8x32xbf16>, vector<32x128xbf16>, vector<8x128xf32> -> vector<8x128xf32>
    %5 = vector.broadcast %2 : vector<1x128xf32> to vector<8x128xf32>
    %6 = arith.addf %4, %5 : vector<8x128xf32>
    %cst_5 = arith.constant 0.000000e+00 : f32
    %7 = vector.broadcast %cst_5 : f32 to vector<8x128xf32>
    %8 = arith.maximumf %6, %7 : vector<8x128xf32>
    %c0_6 = arith.constant 0 : index
    %c0_7 = arith.constant 0 : index
    %9 = vector.load %arg4[%c0_6, %c0_7] : memref<128x128xbf16, #tpu.memory_space<vmem>>, vector<128x128xbf16>
    %c0_8 = arith.constant 0 : index
    %c0_9 = arith.constant 0 : index
    %10 = vector.load %arg5[%c0_8, %c0_9] : memref<1x128xf32, #tpu.memory_space<vmem>>, vector<1x128xf32>
    %11 = arith.truncf %8 : vector<8x128xf32> to vector<8x128xbf16>
    %cst_10 = arith.constant dense<0.000000e+00> : vector<8x128xf32>
    %12 = tpu.matmul %11, %9, %cst_10 {dimension_numbers = #tpu.dot_dimension_numbers<[1], [0], [0], [1], [0, 0, 1, 1], [], []>} : vector<8x128xbf16>, vector<128x128xbf16>, vector<8x128xf32> -> vector<8x128xf32>
    %13 = vector.broadcast %10 : vector<1x128xf32> to vector<8x128xf32>
    %14 = arith.addf %12, %13 : vector<8x128xf32>
    %cst_11 = arith.constant 0.000000e+00 : f32
    %15 = vector.broadcast %cst_11 : f32 to vector<8x128xf32>
    %16 = arith.maximumf %14, %15 : vector<8x128xf32>
    %c0_12 = arith.constant 0 : index
    %c0_13 = arith.constant 0 : index
    %17 = vector.load %arg6[%c0_12, %c0_13] : memref<128x128xbf16, #tpu.memory_space<vmem>>, vector<128x128xbf16>
    %c0_14 = arith.constant 0 : index
    %c0_15 = arith.constant 0 : index
    %18 = vector.load %arg7[%c0_14, %c0_15] : memref<1x128xf32, #tpu.memory_space<vmem>>, vector<1x128xf32>
    %19 = arith.truncf %16 : vector<8x128xf32> to vector<8x128xbf16>
    %cst_16 = arith.constant dense<0.000000e+00> : vector<8x128xf32>
    %20 = tpu.matmul %19, %17, %cst_16 {dimension_numbers = #tpu.dot_dimension_numbers<[1], [0], [0], [1], [0, 0, 1, 1], [], []>} : vector<8x128xbf16>, vector<128x128xbf16>, vector<8x128xf32> -> vector<8x128xf32>
    %21 = vector.broadcast %18 : vector<1x128xf32> to vector<8x128xf32>
    %22 = arith.addf %20, %21 : vector<8x128xf32>
    %cst_17 = arith.constant dense<0xFF800000> : vector<8xf32>
    %23 = vector.multi_reduction <maximumf>, %22, %cst_17 [1] : vector<8x128xf32> to vector<8xf32>
    %24 = vector.shape_cast %23 : vector<8xf32> to vector<8x1xf32>
    %25 = vector.broadcast %24 : vector<8x1xf32> to vector<8x128xf32>
    %26 = arith.subf %22, %25 : vector<8x128xf32>
    %27 = math.exp %26 : vector<8x128xf32>
    %cst_18 = arith.constant dense<0.000000e+00> : vector<8xf32>
    %28 = vector.multi_reduction <add>, %27, %cst_18 [1] : vector<8x128xf32> to vector<8xf32>
    %29 = vector.shape_cast %28 : vector<8xf32> to vector<8x1xf32>
    %30 = vector.broadcast %29 : vector<8x1xf32> to vector<8x128xf32>
    %31 = arith.divf %27, %30 : vector<8x128xf32>
    %c0_19 = arith.constant 0 : index
    %c0_20 = arith.constant 0 : index
    %32 = vector.load %arg8[%c0_19, %c0_20] : memref<8x128xf32, #tpu.memory_space<vmem>>, vector<8x128xf32>
    tpu.vector_store %arg8[%c0_19, %c0_20], %31 {strides = array<i32>} : memref<8x128xf32, #tpu.memory_space<vmem>>, vector<8x128xf32>,
    return
  }
  func.func @transform_0(%arg0: i32) -> (i32, i32) {
    %c0_i32 = arith.constant 0 : i32
    %c0_i32_0 = arith.constant 0 : i32
    return %arg0, %c0_i32 : i32, i32
  }
  func.func @transform_1(%arg0: i32) -> (i32, i32) {
    %c0_i32 = arith.constant 0 : i32
    %c0_i32_0 = arith.constant 0 : i32
    %c0_i32_1 = arith.constant 0 : i32
    return %c0_i32, %c0_i32_0 : i32, i32
  }
  func.func @transform_2(%arg0: i32) -> (i32, i32) {
    %c0_i32 = arith.constant 0 : i32
    %c0_i32_0 = arith.constant 0 : i32
    %c0_i32_1 = arith.constant 0 : i32
    return %c0_i32, %c0_i32_0 : i32, i32
  }
  func.func @transform_3(%arg0: i32) -> (i32, i32) {
    %c0_i32 = arith.constant 0 : i32
    %c0_i32_0 = arith.constant 0 : i32
    %c0_i32_1 = arith.constant 0 : i32
    return %c0_i32, %c0_i32_0 : i32, i32
  }
  func.func @transform_4(%arg0: i32) -> (i32, i32) {
    %c0_i32 = arith.constant 0 : i32
    %c0_i32_0 = arith.constant 0 : i32
    %c0_i32_1 = arith.constant 0 : i32
    return %c0_i32, %c0_i32_0 : i32, i32
  }
  func.func @transform_5(%arg0: i32) -> (i32, i32) {
    %c0_i32 = arith.constant 0 : i32
    %c0_i32_0 = arith.constant 0 : i32
    %c0_i32_1 = arith.constant 0 : i32
    return %c0_i32, %c0_i32_0 : i32, i32
  }
  func.func @transform_6(%arg0: i32) -> (i32, i32) {
    %c0_i32 = arith.constant 0 : i32
    %c0_i32_0 = arith.constant 0 : i32
    %c0_i32_1 = arith.constant 0 : i32
    return %c0_i32, %c0_i32_0 : i32, i32
  }
  func.func @transform_7(%arg0: i32) -> (i32, i32) {
    %c0_i32 = arith.constant 0 : i32
    %c0_i32_0 = arith.constant 0 : i32
    return %arg0, %c0_i32 : i32, i32
  }
}

</mosaic_0001>

<llo_original>
// kernel: mlp_forward.1
$region0: #{mlp_forward.1}
  #allocation0 [shape = 'u32[]', space=smem, size = 0x4, offset = 0x4, fixed_abs, tag = 'smem constant byte address 0x4 - core index']
  #allocation1 [shape = 'u32[72,128]{1,0:T(1,128)}', space=vmem, size = 0x9000, scoped, tag = 'internal scratch']
  %s0 = inlined_call_operand.hbm [shape: f32[8,32], index: 0, kind: input, shape index: {}]
  %s1 = inlined_call_operand.hbm [shape: bf16[32,128], index: 1, kind: input, shape index: {}]
  %s2 = inlined_call_operand.hbm [shape: f32[1,128], index: 2, kind: input, shape index: {}]
  %s3 = inlined_call_operand.hbm [shape: bf16[128,128], index: 3, kind: input, shape index: {}]
  %s4 = inlined_call_operand.vmem [shape: f32[1,128], index: 4, kind: input, shape index: {}]
  %s5 = inlined_call_operand.hbm [shape: bf16[128,128], index: 5, kind: input, shape index: {}]
  %s6 = inlined_call_operand.vmem [shape: f32[1,128], index: 6, kind: input, shape index: {}]
  %s7 = inlined_call_operand.hbm [shape: f32[8,128], index: 7, kind: output, shape index: {}]
  %s8 = sld [smem:[#allocation0]]
  $region58: #{mlp_forward.1} parent=0
    _
  %s10 = ssub.s32 1, %s8
  %s11 = scalar_select 0, %s10, %s8
  $region1: #{mlp_forward.1} parent=0
    #allocation2 [shape = 'u8[4096]{0}', space=vmem, size = 0x1000, scoped, tag = 'input window, operand 0, single buffered']
    #allocation3 [shape = 's32[1]{0}', space=sflag, size = 0x4, scoped, tag = 'scoped memory for mlp_forward.1']
    #allocation4 [shape = 's32[1]{0}', space=sflag, size = 0x4, scoped, tag = 'scoped memory for mlp_forward.1']
    #allocation5 [shape = 'u8[8192]{0}', space=vmem, size = 0x2000, scoped, tag = 'input window, operand 1, single buffered']
    #allocation6 [shape = 's32[1]{0}', space=sflag, size = 0x4, scoped, tag = 'scoped memory for mlp_forward.1']
    #allocation7 [shape = 'u8[512]{0}', space=vmem, size = 0x400, scoped, tag = 'input window, operand 2, single buffered']
    #allocation8 [shape = 'u8[32768]{0}', space=vmem, size = 0x8000, scoped, tag = 'input window, operand 3, single buffered']
    #allocation9 [shape = 's32[1]{0}', space=sflag, size = 0x4, scoped, tag = 'scoped memory for mlp_forward.1']
    #allocation10 [shape = 'u8[32768]{0}', space=vmem, size = 0x8000, scoped, tag = 'input window, operand 5, single buffered']
    #allocation11 [shape = 'u8[4096]{0}', space=vmem, size = 0x1000, scoped, tag = 'output window, operand 0, single buffered']
    %12 = vsyncpa [#allocation3], 0
    %13 = vsyncpa [#allocation6], 0
    %14 = vsyncpa [#allocation9], 0
    %15 = vsyncpa [#allocation4], 0
    // Predicated region
    $region2: #{mlp_forward.1} parent=1 // pred_check
      _
    $region3: #{mlp_forward.1} parent=1 // pred_check_branch
      %17 = sbr.rel (0) target = $region5
    $region4: #{mlp_forward.1} parent=1 // pred_region
      %19 = vsyncadd [#allocation3], 0
      %s21 = sshll.u32 %s0, 4
      %s22 = int_to_ptr.hbm [resolvable:$true] %s21
      %s23 = sshll.u32 [#allocation2], 4
      %s24 = int_to_ptr.vmem [resolvable:$true] %s23
      %26 = dma.hbm_to_vmem [thread:$0]  %s22, 128, %s24, [#allocation3]
    $region5: #{mlp_forward.1} parent=1 // pred_fallthru
      _
    // Predicated region
    $region6: #{mlp_forward.1} parent=1 // pred_check
      _
    $region7: #{mlp_forward.1} parent=1 // pred_check_branch
      %28 = sbr.rel (0) target = $region9
    $region8: #{mlp_forward.1} parent=1 // pred_region
      %30 = vsyncadd [#allocation6], 0
      %s31 = sshll.u32 %s1, 4
      %s32 = int_to_ptr.hbm [resolvable:$true] %s31
      %s33 = sshll.u32 [#allocation5], 4
      %s34 = int_to_ptr.vmem [resolvable:$true] %s33
      %39 = dma.hbm_to_vmem [thread:$0]  %s32, 256, %s34, [#allocation6], 64, 64, 4
    $region9: #{mlp_forward.1} parent=1 // pred_fallthru
      _
    // Predicated region
    $region10: #{mlp_forward.1} parent=1 // pred_check
      _
    $region11: #{mlp_forward.1} parent=1 // pred_check_branch
      %41 = sbr.rel (0) target = $region13
    $region12: #{mlp_forward.1} parent=1 // pred_region
      %43 = vsyncadd [#allocation6], 0
      %s45 = sshll.u32 %s2, 4
      %s46 = int_to_ptr.hbm [resolvable:$true] %s45
      %s47 = sshll.u32 [#allocation7], 4
      %s48 = int_to_ptr.vmem [resolvable:$true] %s47
      %50 = dma.hbm_to_vmem [thread:$0]  %s46, 16, %s48, [#allocation6]
    $region13: #{mlp_forward.1} parent=1 // pred_fallthru
      _
    // Predicated region
    $region14: #{mlp_forward.1} parent=1 // pred_check
      _
    $region15: #{mlp_forward.1} parent=1 // pred_check_branch
      %52 = sbr.rel (0) target = $region17
    $region16: #{mlp_forward.1} parent=1 // pred_region
      %54 = vsyncadd [#allocation9], 0
      %s55 = sshll.u32 %s3, 4
      %s56 = int_to_ptr.hbm [resolvable:$true] %s55
      %s57 = sshll.u32 [#allocation8], 4
      %s58 = int_to_ptr.vmem [resolvable:$true] %s57
      %63 = dma.hbm_to_vmem [thread:$0]  %s56, 1024, %s58, [#allocation9], 64, 64, 4
    $region17: #{mlp_forward.1} parent=1 // pred_fallthru
      _
    // Predicated region
    $region18: #{mlp_forward.1} parent=1 // pred_check
      _
    $region19: #{mlp_forward.1} parent=1 // pred_check_branch
      %65 = sbr.rel (0) target = $region21
    $region20: #{mlp_forward.1} parent=1 // pred_region
      _
    $region21: #{mlp_forward.1} parent=1 // pred_fallthru
      _
    // Predicated region
    $region22: #{mlp_forward.1} parent=1 // pred_check
      _
    $region23: #{mlp_forward.1} parent=1 // pred_check_branch
      %67 = sbr.rel (0) target = $region25
    $region24: #{mlp_forward.1} parent=1 // pred_region
      %69 = vsyncadd [#allocation9], 0
      %s70 = sshll.u32 %s5, 4
      %s71 = int_to_ptr.hbm [resolvable:$true] %s70
      %s72 = sshll.u32 [#allocation10], 4
      %s73 = int_to_ptr.vmem [resolvable:$true] %s72
      %78 = dma.hbm_to_vmem [thread:$0]  %s71, 1024, %s73, [#allocation9], 64, 64, 4
    $region25: #{mlp_forward.1} parent=1 // pred_fallthru
      _
    // Predicated region
    $region26: #{mlp_forward.1} parent=1 // pred_check
      _
    $region27: #{mlp_forward.1} parent=1 // pred_check_branch
      %80 = sbr.rel (0) target = $region29
    $region28: #{mlp_forward.1} parent=1 // pred_region
      _
    $region29: #{mlp_forward.1} parent=1 // pred_fallthru
      _
    // Predicated region
    $region30: #{mlp_forward.1} parent=1 // pred_check
      _
    $region31: #{mlp_forward.1} parent=1 // pred_check_branch
      %82 = sbr.rel (0) target = $region33
    $region32: #{mlp_forward.1} parent=1 // pred_region
      %84 = dma.done [#allocation3], 128
    $region33: #{mlp_forward.1} parent=1 // pred_fallthru
      _
    // Predicated region
    $region34: #{mlp_forward.1} parent=1 // pred_check
      _
    $region35: #{mlp_forward.1} parent=1 // pred_check_branch
      %86 = sbr.rel (0) target = $region37
    $region36: #{mlp_forward.1} parent=1 // pred_region
      %88 = dma.done [#allocation6], 256
    $region37: #{mlp_forward.1} parent=1 // pred_fallthru
      _
    // Predicated region
    $region38: #{mlp_forward.1} parent=1 // pred_check
      _
    $region39: #{mlp_forward.1} parent=1 // pred_check_branch
      %90 = sbr.rel (0) target = $region41
    $region40: #{mlp_forward.1} parent=1 // pred_region
      %92 = dma.done [#allocation6], 16
    $region41: #{mlp_forward.1} parent=1 // pred_fallthru
      _
    // Predicated region
    $region42: #{mlp_forward.1} parent=1 // pred_check
      _
    $region43: #{mlp_forward.1} parent=1 // pred_check_branch
      %94 = sbr.rel (0) target = $region45
    $region44: #{mlp_forward.1} parent=1 // pred_region
      %96 = dma.done [#allocation9], 1024
    $region45: #{mlp_forward.1} parent=1 // pred_fallthru
      _
    // Predicated region
    $region46: #{mlp_forward.1} parent=1 // pred_check
      _
    $region47: #{mlp_forward.1} parent=1 // pred_check_branch
      %98 = sbr.rel (0) target = $region49
    $region48: #{mlp_forward.1} parent=1 // pred_region
      %100 = dma.done [#allocation9], 1024
    $region49: #{mlp_forward.1} parent=1 // pred_fallthru
      _
    %v102 = vld [vmem:[#allocation2] sm:$0xff]
    %v103 = vld [vmem:[#allocation5] sm:$0xf]
    %v104 = vld [vmem:[#allocation5 + $0x4] sm:$0xf]
    %v105 = vld [vmem:[#allocation5 + $0x8] sm:$0xf]
    %v106 = vld [vmem:[#allocation5 + $0xc] sm:$0xf]
    %v107 = vld [vmem:[#allocation7] sm:$0x1]
    %v108 = vpack.c.bf16 %v102, %v102
    %v110 = vperm.slane %v107, 0
    %v116 = vunpack.c.l.b16 %v103
    %v117 = vunpack.c.l.b16 %v104
    %v118 = vunpack.c.l.b16 %v105
    %v119 = vunpack.c.l.b16 %v106
    %v120 = vpack.c.b16 %v117, %v116
    %v121 = vpack.c.b16 %v119, %v118
    %vm124 = vcmask 261120
    %v126 = vsel %vm124, %v108, 0
    %128 = vmatpush.bf16.msra.mxu0 0
    %129 = vmatpush.bf16.msra.mxu0 0
    %130 = vmatpush.bf16.msra.mxu0 0
    %131 = vmatpush.bf16.msra.mxu0 0
    %132 = vmatpush.bf16.msra.mxu0 0
    %133 = vmatpush.bf16.msra.mxu0 0
    %134 = vmatpush.bf16.msra.mxu0 %v121
    %135 = vmatpush.bf16.msra.mxu0 %v120
    %136 = vmatmul.bf16.gmra.mxu0 %v126
    %v137 = vpop.f32.mrf.mxu0
    %v138 = vadd.f32 %v110, %v137
    %v139 = vpop.f32.mrf.mxu0
    %140 = vdwg.mxu0
    %v141 = vmax.f32 %v138, 0.0
    %v142 = vld [vmem:[#allocation8] sm:$0xf]
    %v143 = vld [vmem:[#allocation8 + $0x4] sm:$0xf]
    %v144 = vld [vmem:[#allocation8 + $0x8] sm:$0xf]
    %v145 = vld [vmem:[#allocation8 + $0xc] sm:$0xf]
    %v146 = vld [vmem:[#allocation8 + $0x10] sm:$0xf]
    %v147 = vld [vmem:[#allocation8 + $0x14] sm:$0xf]
    %v148 = vld [vmem:[#allocation8 + $0x18] sm:$0xf]
    %v149 = vld [vmem:[#allocation8 + $0x1c] sm:$0xf]
    %v150 = vld [vmem:[#allocation8 + $0x20] sm:$0xf]
    %v151 = vld [vmem:[#allocation8 + $0x24] sm:$0xf]
    %v152 = vld [vmem:[#allocation8 + $0x28] sm:$0xf]
    %v153 = vld [vmem:[#allocation8 + $0x2c] sm:$0xf]
    %v154 = vld [vmem:[#allocation8 + $0x30] sm:$0xf]
    %v155 = vld [vmem:[#allocation8 + $0x34] sm:$0xf]
    %v156 = vld [vmem:[#allocation8 + $0x38] sm:$0xf]
    %v157 = vld [vmem:[#allocation8 + $0x3c] sm:$0xf]
    %v158 = vld [vmem:[%s4] sm:$0x1]
    %v159 = vpack.c.bf16 %v141, %v141
    %v161 = vperm.slane %v158, 0
    %v179 = vunpack.c.l.b16 %v142
    %v180 = vunpack.c.l.b16 %v143
    %v181 = vunpack.c.l.b16 %v144
    %v182 = vunpack.c.l.b16 %v145
    %v183 = vunpack.c.l.b16 %v146
    %v184 = vunpack.c.l.b16 %v147
    %v185 = vunpack.c.l.b16 %v148
    %v186 = vunpack.c.l.b16 %v149
    %v187 = vunpack.c.l.b16 %v150
    %v188 = vunpack.c.l.b16 %v151
    %v189 = vunpack.c.l.b16 %v152
    %v190 = vunpack.c.l.b16 %v153
    %v191 = vunpack.c.l.b16 %v154
    %v192 = vunpack.c.l.b16 %v155
    %v193 = vunpack.c.l.b16 %v156
    %v194 = vunpack.c.l.b16 %v157
    %v195 = vpack.c.b16 %v180, %v179
    %v196 = vpack.c.b16 %v182, %v181
    %v197 = vpack.c.b16 %v184, %v183
    %v198 = vpack.c.b16 %v186, %v185
    %v199 = vpack.c.b16 %v188, %v187
    %v200 = vpack.c.b16 %v190, %v189
    %v201 = vpack.c.b16 %v192, %v191
    %v202 = vpack.c.b16 %v194, %v193
    %211 = vmatpush.bf16.msra.mxu0 %v202
    %212 = vmatpush.bf16.msra.mxu0 %v201
    %213 = vmatpush.bf16.msra.mxu0 %v200
    %214 = vmatpush.bf16.msra.mxu0 %v199
    %215 = vmatpush.bf16.msra.mxu0 %v198
    %216 = vmatpush.bf16.msra.mxu0 %v197
    %217 = vmatpush.bf16.msra.mxu0 %v196
    %218 = vmatpush.bf16.msra.mxu0 %v195
    %219 = vmatmul.bf16.gmra.mxu0 %v159
    %v220 = vpop.f32.mrf.mxu0
    %v221 = vadd.f32 %v161, %v220
    %v222 = vpop.f32.mrf.mxu0
    %223 = vdwg.mxu0
    %v224 = vmax.f32 %v221, 0.0
    %v225 = vld [vmem:[#allocation10] sm:$0xf]
    %v226 = vld [vmem:[#allocation10 + $0x4] sm:$0xf]
    %v227 = vld [vmem:[#allocation10 + $0x8] sm:$0xf]
    %v228 = vld [vmem:[#allocation10 + $0xc] sm:$0xf]
    %v229 = vld [vmem:[#allocation10 + $0x10] sm:$0xf]
    %v230 = vld [vmem:[#allocation10 + $0x14] sm:$0xf]
    %v231 = vld [vmem:[#allocation10 + $0x18] sm:$0xf]
    %v232 = vld [vmem:[#allocation10 + $0x1c] sm:$0xf]
    %v233 = vld [vmem:[#allocation10 + $0x20] sm:$0xf]
    %v234 = vld [vmem:[#allocation10 + $0x24] sm:$0xf]
    %v235 = vld [vmem:[#allocation10 + $0x28] sm:$0xf]
    %v236 = vld [vmem:[#allocation10 + $0x2c] sm:$0xf]
    %v237 = vld [vmem:[#allocation10 + $0x30] sm:$0xf]
    %v238 = vld [vmem:[#allocation10 + $0x34] sm:$0xf]
    %v239 = vld [vmem:[#allocation10 + $0x38] sm:$0xf]
    %v240 = vld [vmem:[#allocation10 + $0x3c] sm:$0xf]
    %v241 = vld [vmem:[%s6] sm:$0x1]
    %v242 = vpack.c.bf16 %v224, %v224
    %v244 = vperm.slane %v241, 0
    %v262 = vunpack.c.l.b16 %v225
    %v263 = vunpack.c.l.b16 %v226
    %v264 = vunpack.c.l.b16 %v227
    %v265 = vunpack.c.l.b16 %v228
    %v266 = vunpack.c.l.b16 %v229
    %v267 = vunpack.c.l.b16 %v230
    %v268 = vunpack.c.l.b16 %v231
    %v269 = vunpack.c.l.b16 %v232
    %v270 = vunpack.c.l.b16 %v233
    %v271 = vunpack.c.l.b16 %v234
    %v272 = vunpack.c.l.b16 %v235
    %v273 = vunpack.c.l.b16 %v236
    %v274 = vunpack.c.l.b16 %v237
    %v275 = vunpack.c.l.b16 %v238
    %v276 = vunpack.c.l.b16 %v239
    %v277 = vunpack.c.l.b16 %v240
    %v278 = vpack.c.b16 %v263, %v262
    %v279 = vpack.c.b16 %v265, %v264
    %v280 = vpack.c.b16 %v267, %v266
    %v281 = vpack.c.b16 %v269, %v268
    %v282 = vpack.c.b16 %v271, %v270
    %v283 = vpack.c.b16 %v273, %v272
    %v284 = vpack.c.b16 %v275, %v274
    %v285 = vpack.c.b16 %v277, %v276
    %294 = vmatpush.bf16.msra.mxu0 %v285
    %295 = vmatpush.bf16.msra.mxu0 %v284
    %296 = vmatpush.bf16.msra.mxu0 %v283
    %297 = vmatpush.bf16.msra.mxu0 %v282
    %298 = vmatpush.bf16.msra.mxu0 %v281
    %299 = vmatpush.bf16.msra.mxu0 %v280
    %300 = vmatpush.bf16.msra.mxu0 %v279
    %301 = vmatpush.bf16.msra.mxu0 %v278
    %302 = vmatmul.bf16.gmra.mxu0 %v242
    %v303 = vpop.f32.mrf.mxu0
    %v304 = vadd.f32 %v244, %v303
    %v305 = vpop.f32.mrf.mxu0
    %306 = vdwg.mxu0
    %307 = vmax.xlane.f32.xlu0 %v304
    %v308 = vpop.xlane.xlu0 %307
    %v309 = vsub.f32 %v304, %v308
    %v310 = vmul.f32 %v309, 1.442695
    %v311 = vpow.pop %v310
    %312 = vadd.xlane.f32.xlu0 %v311
    %v313 = vpop.xlane.xlu0 %312
    %v314 = vrcp.pop %v313
    %v315 = vmul.f32 %v313, %v314
    %v316 = vsub.f32 1.0, %v315
    %v317 = vmul.f32 %v314, %v316
    %v318 = vadd.f32 %v314, %v317
    %vm319 = vweird.f32 %v313
    %vm320 = vweird.f32 %v314
    %vm321 = vmor %vm319, %vm320
    %v322 = vsel %vm321, %v314, %v318
    %v323 = vand.u32 2147483647, %v313
    %vm324 = vcmp.eq.f32.partialorder %v323, 8.507059e+37
    %v325 = vand.u32 %v313, 2147483648
    %v326 = vor.u32 1.1754944e-38, %v325
    %v327 = vsel %vm324, %v326, %v322
    %v328 = vmul.f32 %v311, %v327
    %329 = vst [vmem:[#allocation11] sm:$0xff] %v328
    // Predicated region
    $region50: #{mlp_forward.1} parent=1 // pred_check
      _
    $region51: #{mlp_forward.1} parent=1 // pred_check_branch
      %331 = sbr.rel (0) target = $region53
    $region52: #{mlp_forward.1} parent=1 // pred_region
      %333 = vsyncadd [#allocation4], 0
      %s335 = sshll.u32 [#allocation11], 4
      %s336 = int_to_ptr.vmem [resolvable:$true] %s335
      %s337 = sshll.u32 %s7, 4
      %s338 = int_to_ptr.hbm [resolvable:$true] %s337
      %340 = dma.vmem_to_hbm [thread:$0]  %s336, 128, %s338, [#allocation4]
    $region53: #{mlp_forward.1} parent=1 // pred_fallthru
      _
    // Predicated region
    $region54: #{mlp_forward.1} parent=1 // pred_check
      _
    $region55: #{mlp_forward.1} parent=1 // pred_check_branch
      %342 = sbr.rel (0) target = $region57
    $region56: #{mlp_forward.1} parent=1 // pred_region
      %344 = dma.done [#allocation4], 128
    $region57: #{mlp_forward.1} parent=1 // pred_fallthru
      _
    %345 = vsyncpa [#allocation3], 1
    %346 = vsyncpa [#allocation6], 1
    %347 = vsyncpa [#allocation9], 1
    %348 = vsyncpa [#allocation4], 1

</llo_original>
